<compile_context>
chip_gen: v6e
topology: v6e:2x2x1
jax: 0.10.0
libtpu: 0.0.40
codegen_flags: <defaults>
</compile_context>

<pallas_src>
import math
import functools

import jax
import jax.numpy as jnp
from jax.experimental import pallas as pl
from jax.experimental.pallas import tpu as pltpu

D_MODEL = 512          # matches the reference d_model
MAX_LEN = 25           # matches the reference max_len
VOCAB = 64             # synthetic vocab size


# ----------------------------- Pallas kernel --------------------------------

def _embed_pe_kernel(ids_ref, table_ref, pe_ref, o_ref, *, seq_len, vocab, scale):
    """One grid step == one batch row.

    ids_ref:   (B*S,) int32 in SMEM (scalar prefetch)
    table_ref: (V, D) f32 in VMEM, resident across the whole grid
    pe_ref:    (S, D) f32 in VMEM, resident across the whole grid
    o_ref:     (1, S, D) f32 output tile
    """
    b = pl.program_id(0)
    base = b * seq_len

    # In-kernel gather: dynamic row slices from the VMEM-resident table.
    rows = []
    for s in range(seq_len):                      # static, small (S = 8)
        tok = ids_ref[base + s]                   # scalar read from SMEM
        tok = jnp.clip(tok, 0, vocab - 1)         # guard OOB ids (PyTorch would raise)
        rows.append(table_ref[pl.ds(tok, 1), :])  # (1, D) dynamic row load
    gathered = jnp.concatenate(rows, axis=0)      # (S, D) dense block

    # Fused scale + positional add, dense (S, D) vreg math and unmasked store.
    o_ref[0, :, :] = gathered * scale + pe_ref[...]


# ----------------------------- wrapper ---------------------------------------

def embeddings_forward(params, encoded_words):
    """params: {'table': (V, D) f32, 'pe': (1, MAX_LEN, D) f32}
       encoded_words: (B, S) int32 token ids -> (B, S, D) f32."""
    table, pe = params['table'], params['pe']
    B, S = encoded_words.shape
    V, D = table.shape

    if S > pe.shape[1]:
        raise ValueError(f"sequence length {S} exceeds positional-encoding "
                         f"max_len {pe.shape[1]}")

    ids_flat = encoded_words.reshape(B * S).astype(jnp.int32)
    pe_slice = pe[0, :S, :]                       # (S, D) static slice, done once

    kernel = functools.partial(
        _embed_pe_kernel,
        seq_len=int(S),
        vocab=int(V),
        scale=float(math.sqrt(D)),                # plain Python float (no captured tracer)
    )

    out = pl.pallas_call(
        kernel,
        out_shape=jax.ShapeDtypeStruct((B, S, D), jnp.float32),
        grid_spec=pltpu.PrefetchScalarGridSpec(
            num_scalar_prefetch=1,                # token ids -> SMEM
            grid=(B,),
            in_specs=[
                # whole embedding table, resident in VMEM (constant block index)
                pl.BlockSpec((V, D), lambda b, ids: (0, 0)),
                # positional encodings for positions [0, S), resident in VMEM
                pl.BlockSpec((S, D), lambda b, ids: (0, 0)),
            ],
            out_specs=pl.BlockSpec((1, S, D), lambda b, ids: (b, 0, 0)),
        ),
        compiler_params=pltpu.CompilerParams(
            dimension_semantics=("parallel",)),
    )(ids_flat, table, pe_slice)

    return out


# ----------------------------- init ------------------------------------------

def _build_pe(max_len, d_model):
    # Faithful to the reference formula (note: the cos term intentionally uses
    # exponent 2*(i+1)/d_model, exactly as in the PyTorch module).
    pos = jnp.arange(max_len, dtype=jnp.float32)[:, None]          # (L, 1)
    i = jnp.arange(0, d_model, 2, dtype=jnp.float32)[None, :]      # (1, D/2)
    sin_part = jnp.sin(pos / 10000.0 ** (2.0 * i / d_model))
    cos_part = jnp.cos(pos / 10000.0 ** (2.0 * (i + 1.0) / d_model))
    pe = jnp.stack([sin_part, cos_part], axis=-1).reshape(max_len, d_model)
    return pe[None]                                                # (1, L, D)


def init_params(key):
    # nn.Embedding default init: N(0, 1)
    table = jax.random.normal(key, (VOCAB, D_MODEL), jnp.float32)
    return {'table': table, 'pe': _build_pe(MAX_LEN, D_MODEL)}


# ----------------------------- main -------------------------------------------

if __name__ == "__main__":
    key = jax.random.PRNGKey(0)
    k_table, k_ids = jax.random.split(key)
    params = init_params(k_table)

    B, S = 2, 8
    encoded_words = jax.random.randint(k_ids, (B, S), 0, VOCAB, dtype=jnp.int32)

    fwd = jax.jit(embeddings_forward)
    out = jax.block_until_ready(fwd(params, encoded_words))
    assert out.shape == (B, S, D_MODEL), out.shape

    # pure-JAX reference check (dropout = identity)
    ref = jnp.take(params['table'], encoded_words, axis=0) * math.sqrt(D_MODEL)
    ref = ref + params['pe'][:, :S, :]
    assert bool(jnp.all(jnp.isfinite(out)))
    assert bool(jnp.allclose(out, ref, atol=1e-5, rtol=1e-5))
    print("KERNEL_OK")
</pallas_src>

<mosaic_0001>
module attributes {stable_mosaic.version = 11 : i64} {
  func.func @_embed_pe_kernel(%arg0: i32, %arg1: memref<16xi32, #tpu.memory_space<smem>>, %arg2: memref<64x512xf32, #tpu.memory_space<vmem>>, %arg3: memref<8x512xf32, #tpu.memory_space<vmem>>, %arg4: memref<1x8x512xf32, #tpu.memory_space<vmem>>) attributes {dimension_semantics = [#tpu.dimension_semantics<parallel>], iteration_bounds = array<i64: 2>, scalar_prefetch = 1 : i64, scratch_operands = 0 : i64, tpu.core_type = #tpu.core_type<tc>, window_params = [{pipeline_mode = #tpu.pipeline_mode<synchronous>, transform_indices = @transform_0, window_bounds = array<i64: 64, 512>}, {pipeline_mode = #tpu.pipeline_mode<synchronous>, transform_indices = @transform_1, window_bounds = array<i64: 8, 512>}, {transform_indices = @transform_2, window_bounds = array<i64: 1, 8, 512>}]} {
    %c8_i32 = arith.constant 8 : i32
    %0 = arith.muli %arg0, %c8_i32 : i32
    %c0_i32 = arith.constant 0 : i32
    %1 = arith.addi %0, %c0_i32 : i32
    %2 = arith.index_cast %1 : i32 to index
    %3 = memref.load %arg1[%2] : memref<16xi32, #tpu.memory_space<smem>>
    %c0_i32_0 = arith.constant 0 : i32
    %c63_i32 = arith.constant 63 : i32
    %4 = arith.maxsi %c0_i32_0, %3 : i32
    %5 = arith.minsi %c63_i32, %4 : i32
    %6 = arith.index_cast %5 : i32 to index
    %c0 = arith.constant 0 : index
    %7 = vector.load %arg2[%6, %c0] : memref<64x512xf32, #tpu.memory_space<vmem>>, vector<1x512xf32>
    %c1_i32 = arith.constant 1 : i32
    %8 = arith.addi %0, %c1_i32 : i32
    %9 = arith.index_cast %8 : i32 to index
    %10 = memref.load %arg1[%9] : memref<16xi32, #tpu.memory_space<smem>>
    %c0_i32_1 = arith.constant 0 : i32
    %c63_i32_2 = arith.constant 63 : i32
    %11 = arith.maxsi %c0_i32_1, %10 : i32
    %12 = arith.minsi %c63_i32_2, %11 : i32
    %13 = arith.index_cast %12 : i32 to index
    %c0_3 = arith.constant 0 : index
    %14 = vector.load %arg2[%13, %c0_3] : memref<64x512xf32, #tpu.memory_space<vmem>>, vector<1x512xf32>
    %c2_i32 = arith.constant 2 : i32
    %15 = arith.addi %0, %c2_i32 : i32
    %16 = arith.index_cast %15 : i32 to index
    %17 = memref.load %arg1[%16] : memref<16xi32, #tpu.memory_space<smem>>
    %c0_i32_4 = arith.constant 0 : i32
    %c63_i32_5 = arith.constant 63 : i32
    %18 = arith.maxsi %c0_i32_4, %17 : i32
    %19 = arith.minsi %c63_i32_5, %18 : i32
    %20 = arith.index_cast %19 : i32 to index
    %c0_6 = arith.constant 0 : index
    %21 = vector.load %arg2[%20, %c0_6] : memref<64x512xf32, #tpu.memory_space<vmem>>, vector<1x512xf32>
    %c3_i32 = arith.constant 3 : i32
    %22 = arith.addi %0, %c3_i32 : i32
    %23 = arith.index_cast %22 : i32 to index
    %24 = memref.load %arg1[%23] : memref<16xi32, #tpu.memory_space<smem>>
    %c0_i32_7 = arith.constant 0 : i32
    %c63_i32_8 = arith.constant 63 : i32
    %25 = arith.maxsi %c0_i32_7, %24 : i32
    %26 = arith.minsi %c63_i32_8, %25 : i32
    %27 = arith.index_cast %26 : i32 to index
    %c0_9 = arith.constant 0 : index
    %28 = vector.load %arg2[%27, %c0_9] : memref<64x512xf32, #tpu.memory_space<vmem>>, vector<1x512xf32>
    %c4_i32 = arith.constant 4 : i32
    %29 = arith.addi %0, %c4_i32 : i32
    %30 = arith.index_cast %29 : i32 to index
    %31 = memref.load %arg1[%30] : memref<16xi32, #tpu.memory_space<smem>>
    %c0_i32_10 = arith.constant 0 : i32
    %c63_i32_11 = arith.constant 63 : i32
    %32 = arith.maxsi %c0_i32_10, %31 : i32
    %33 = arith.minsi %c63_i32_11, %32 : i32
    %34 = arith.index_cast %33 : i32 to index
    %c0_12 = arith.constant 0 : index
    %35 = vector.load %arg2[%34, %c0_12] : memref<64x512xf32, #tpu.memory_space<vmem>>, vector<1x512xf32>
    %c5_i32 = arith.constant 5 : i32
    %36 = arith.addi %0, %c5_i32 : i32
    %37 = arith.index_cast %36 : i32 to index
    %38 = memref.load %arg1[%37] : memref<16xi32, #tpu.memory_space<smem>>
    %c0_i32_13 = arith.constant 0 : i32
    %c63_i32_14 = arith.constant 63 : i32
    %39 = arith.maxsi %c0_i32_13, %38 : i32
    %40 = arith.minsi %c63_i32_14, %39 : i32
    %41 = arith.index_cast %40 : i32 to index
    %c0_15 = arith.constant 0 : index
    %42 = vector.load %arg2[%41, %c0_15] : memref<64x512xf32, #tpu.memory_space<vmem>>, vector<1x512xf32>
    %c6_i32 = arith.constant 6 : i32
    %43 = arith.addi %0, %c6_i32 : i32
    %44 = arith.index_cast %43 : i32 to index
    %45 = memref.load %arg1[%44] : memref<16xi32, #tpu.memory_space<smem>>
    %c0_i32_16 = arith.constant 0 : i32
    %c63_i32_17 = arith.constant 63 : i32
    %46 = arith.maxsi %c0_i32_16, %45 : i32
    %47 = arith.minsi %c63_i32_17, %46 : i32
    %48 = arith.index_cast %47 : i32 to index
    %c0_18 = arith.constant 0 : index
    %49 = vector.load %arg2[%48, %c0_18] : memref<64x512xf32, #tpu.memory_space<vmem>>, vector<1x512xf32>
    %c7_i32 = arith.constant 7 : i32
    %50 = arith.addi %0, %c7_i32 : i32
    %51 = arith.index_cast %50 : i32 to index
    %52 = memref.load %arg1[%51] : memref<16xi32, #tpu.memory_space<smem>>
    %c0_i32_19 = arith.constant 0 : i32
    %c63_i32_20 = arith.constant 63 : i32
    %53 = arith.maxsi %c0_i32_19, %52 : i32
    %54 = arith.minsi %c63_i32_20, %53 : i32
    %55 = arith.index_cast %54 : i32 to index
    %c0_21 = arith.constant 0 : index
    %56 = vector.load %arg2[%55, %c0_21] : memref<64x512xf32, #tpu.memory_space<vmem>>, vector<1x512xf32>
    %57 = tpu.concatenate %7, %14, %21, %28, %35, %42, %49, %56 in 0 : vector<1x512xf32>, vector<1x512xf32>, vector<1x512xf32>, vector<1x512xf32>, vector<1x512xf32>, vector<1x512xf32>, vector<1x512xf32>, vector<1x512xf32> -> vector<8x512xf32>
    %cst = arith.constant 22.6274166 : f32
    %58 = vector.broadcast %cst : f32 to vector<8x512xf32>
    %59 = arith.mulf %57, %58 : vector<8x512xf32>
    %c0_22 = arith.constant 0 : index
    %c0_23 = arith.constant 0 : index
    %60 = vector.load %arg3[%c0_22, %c0_23] : memref<8x512xf32, #tpu.memory_space<vmem>>, vector<8x512xf32>
    %61 = arith.addf %59, %60 : vector<8x512xf32>
    %c0_24 = arith.constant 0 : index
    %c0_25 = arith.constant 0 : index
    %c0_26 = arith.constant 0 : index
    %62 = vector.load %arg4[%c0_24, %c0_25, %c0_26] : memref<1x8x512xf32, #tpu.memory_space<vmem>>, vector<1x8x512xf32>
    %63 = vector.shape_cast %62 : vector<1x8x512xf32> to vector<8x512xf32>
    %64 = vector.shape_cast %61 : vector<8x512xf32> to vector<1x8x512xf32>
    tpu.vector_store %arg4[%c0_24, %c0_25, %c0_26], %64 {strides = array<i32>} : memref<1x8x512xf32, #tpu.memory_space<vmem>>, vector<1x8x512xf32>,
    return
  }
  func.func @transform_0(%arg0: i32, %arg1: memref<16xi32, #tpu.memory_space<smem>>) -> (i32, i32) {
    %c0_i32 = arith.constant 0 : i32
    %c0_i32_0 = arith.constant 0 : i32
    %c0_i32_1 = arith.constant 0 : i32
    return %c0_i32, %c0_i32_0 : i32, i32
  }
  func.func @transform_1(%arg0: i32, %arg1: memref<16xi32, #tpu.memory_space<smem>>) -> (i32, i32) {
    %c0_i32 = arith.constant 0 : i32
    %c0_i32_0 = arith.constant 0 : i32
    %c0_i32_1 = arith.constant 0 : i32
    return %c0_i32, %c0_i32_0 : i32, i32
  }
  func.func @transform_2(%arg0: i32, %arg1: memref<16xi32, #tpu.memory_space<smem>>) -> (i32, i32, i32) {
    %c0_i32 = arith.constant 0 : i32
    %c0_i32_0 = arith.constant 0 : i32
    %c0_i32_1 = arith.constant 0 : i32
    return %arg0, %c0_i32, %c0_i32_0 : i32, i32, i32
  }
}

</mosaic_0001>

<llo_original>
// kernel: embeddings_forward.1
$region0: #{embeddings_forward.1}
  #allocation0 [shape = 'u32[]', space=smem, size = 0x4, offset = 0x4, fixed_abs, tag = 'smem constant byte address 0x4 - core index']
  #allocation1 [shape = 'u32[144,128]{1,0:T(1,128)}', space=vmem, size = 0x12000, scoped, tag = 'internal scratch']
  #allocation2 [shape = 's32[1]{0}', space=sflag, size = 0x4, scoped, tag = 'scoped memory for embeddings_forward.1']
  #allocation3 [shape = 'u8[512]{0}', space=smem, size = 0x200, scoped, tag = 'prefetched SMEM operand 0']
  %s0 = inlined_call_operand.vmem [shape: s32[16], index: 0, kind: input, shape index: {}]
  %s1 = inlined_call_operand.hbm [shape: f32[64,512], index: 1, kind: input, shape index: {}]
  %s2 = inlined_call_operand.vmem [shape: f32[8,512], index: 2, kind: input, shape index: {}]
  %s3 = inlined_call_operand.hbm [shape: f32[2,8,512], index: 3, kind: output, shape index: {}]
  %s4 = sld [smem:[#allocation0]]
  $region45: #{embeddings_forward.1} parent=0
    _
  %s6 = ssub.s32 1, %s4
  %s7 = scalar_select 0, %s6, %s4
  %s8 = sshll.u32 %s0, 4
  %s9 = int_to_ptr.vmem [resolvable:$true] %s8
  %11 = dma.vmem_to_smem %s9, 16, [#allocation3], [#allocation2]
  %12 = dma.done [#allocation2], 16
  %13 = sfence
  $region1: #{embeddings_forward.1} parent=0
    #allocation4 [shape = 'u8[131072]{0}', space=vmem, size = 0x20000, scoped, tag = 'input window, operand 1, single buffered']
    #allocation5 [shape = 's32[2]{0}', space=sflag, size = 0x8, scoped, tag = 'scoped memory for embeddings_forward.1']
    #allocation6 [shape = 's32[2]{0}', space=sflag, size = 0x8, scoped, tag = 'scoped memory for embeddings_forward.1']
    #allocation7 [shape = 'u8[32768]{0}', space=vmem, size = 0x8000, scoped, tag = 'output window, operand 0']
    %14 = vsyncpa [#allocation5], 0
    %15 = vsyncpa [#allocation6], 0
    %s16 = scalar_lea.sflag [#allocation6], 1
    %17 = vsyncpa %s16, 0
    loop: start=0, step=1, limit=4
    $region2: #{embeddings_forward.1} parent=1 // loop_pre_header
      _
    $region3: #{embeddings_forward.1} parent=1 // loop_header
      %s19 = sphi 0, %s23
      %p20 = scmp.ge.s32.totalorder %s19, 4
      %s27 = sphi 0, %s27
      %s29 = sphi 0, %s27
      %s30 = sphi 0, %s29
      %s44 = sphi 0, %s30
      %s48 = sphi 0, %s48
      %s50 = sphi 0, %s48
      %s51 = sphi 0, %s50
      %s65 = sphi 0, %s51
      %s71 = sphi 0, %s73
      %s74 = sphi 0, %s71
      %s75 = sphi 0, %s74
      %s91 = sphi 0, %s75
    $region4: #{embeddings_forward.1} parent=1 // loop_header_branch
      %22 = sbr.rel (%p20) target = $region8
    $region5: #{embeddings_forward.1} parent=1 // loop_body
      %s24 = ssub.s32 %s19, 1
      %s25 = ssub.s32 %s19, 2
      %s26 = sadd.s32 %s19, 1
      %s28 = sadd.s32 %s27, 1
      %p31 = scmp.eq.s32.totalorder %s19, 1
      %p32 = scmp.ne.s32.totalorder %s27, %s29
      %p33 = scmp.eq.s32.totalorder %s19, 0
      %p34 = por %p32, %p33
      %p35 = scmp.ne.s32.totalorder %s27, %s29
      %p36 = scmp.eq.s32.totalorder %s24, 1
      %p37 = por %p35, %p36
      %p38 = scmp.ne.s32.totalorder %s29, %s30
      %p39 = scmp.eq.s32.totalorder %s24, 0
      %p40 = por %p38, %p39
      %p41 = scmp.ne.s32.totalorder %s29, %s30
      %p42 = scmp.eq.s32.totalorder %s25, 1
      %p43 = por %p41, %p42
      %p45 = scmp.ne.s32.totalorder %s30, %s44
      %p46 = scmp.eq.s32.totalorder %s25, 0
      %p47 = por %p45, %p46
      %s49 = sadd.s32 %s48, 1
      %p52 = scmp.eq.s32.totalorder %s19, 1
      %p53 = scmp.ne.s32.totalorder %s48, %s50
      %p54 = scmp.eq.s32.totalorder %s19, 0
      %p55 = por %p53, %p54
      %p56 = scmp.ne.s32.totalorder %s48, %s50
      %p57 = scmp.eq.s32.totalorder %s24, 1
      %p58 = por %p56, %p57
      %p59 = scmp.ne.s32.totalorder %s50, %s51
      %p60 = scmp.eq.s32.totalorder %s24, 0
      %p61 = por %p59, %p60
      %p62 = scmp.ne.s32.totalorder %s50, %s51
      %p63 = scmp.eq.s32.totalorder %s25, 1
      %p64 = por %p62, %p63
      %p66 = scmp.ne.s32.totalorder %s51, %s65
      %p67 = scmp.eq.s32.totalorder %s25, 0
      %p68 = por %p66, %p67
      %s69 = ssub.s32 %s19, %s26
      %p70 = scmp.eq.s32.totalorder %s69, 0
      %s72 = sadd.s32 %s71, 1
      %s73 = scalar_select %p70, %s71, %s72
      %p76 = pneg %p70
      %p77 = scmp.eq.s32.totalorder %s19, 1
      %p78 = por %p76, %p77
      %p79 = scmp.ne.s32.totalorder %s71, %s74
      %p80 = scmp.eq.s32.totalorder %s19, 0
      %p81 = por %p79, %p80
      %p82 = scmp.ne.s32.totalorder %s71, %s74
      %p83 = scmp.eq.s32.totalorder %s24, 1
      %p84 = por %p82, %p83
      %p85 = scmp.ne.s32.totalorder %s74, %s75
      %p86 = scmp.eq.s32.totalorder %s24, 0
      %p87 = por %p85, %p86
      %p88 = scmp.ne.s32.totalorder %s74, %s75
      %p89 = scmp.eq.s32.totalorder %s25, 1
      %p90 = por %p88, %p89
      %p92 = scmp.ne.s32.totalorder %s75, %s91
      %p93 = scmp.eq.s32.totalorder %s25, 0
      %p94 = por %p92, %p93
      %p95 = scmp.le.s32.totalorder 1, %s19
      %p96 = scmp.lt.s32.totalorder %s19, 3
      %p97 = pnand %p95, %p96
      %p98 = pneg %p97
      // Predicated region
      $region9: #{embeddings_forward.1} parent=5 // pred_check
        _
      $region10: #{embeddings_forward.1} parent=5 // pred_check_branch
        %100 = sbr.rel (%p97) target = $region12
      $region11: #{embeddings_forward.1} parent=5 // pred_region
        %s101 = ssub.s32 %s19, 1
        // Predicated region
        $region13: #{embeddings_forward.1} parent=11 // pred_check
          %p102 = pneg %p40
        $region14: #{embeddings_forward.1} parent=11 // pred_check_branch
          %104 = sbr.rel (%p102) target = $region16
        $region15: #{embeddings_forward.1} parent=11 // pred_region
          %s106 = ssub.s32 4096, 4096
          %107 = vsyncadd [#allocation5], %s106
          %s108 = sshll.u32 [#allocation4], 4
          %s109 = int_to_ptr.vmem [resolvable:$true] %s108
          %114 = dma.hbm_to_vmem [thread:$0]  %s1, 4096, %s109, [#allocation5], 512, 512, 32
        $region16: #{embeddings_forward.1} parent=11 // pred_fallthru
          _
        // Predicated region
        $region17: #{embeddings_forward.1} parent=11 // pred_check
          %p115 = pneg %p61
        $region18: #{embeddings_forward.1} parent=11 // pred_check_branch
          %117 = sbr.rel (%p115) target = $region20
        $region19: #{embeddings_forward.1} parent=11 // pred_region
          _
        $region20: #{embeddings_forward.1} parent=11 // pred_fallthru
          _
      $region12: #{embeddings_forward.1} parent=5 // pred_fallthru
        _
      %p118 = scmp.lt.s32.totalorder %s19, 2
      // Predicated region
      $region21: #{embeddings_forward.1} parent=5 // pred_check
        %p119 = pneg %p118
      $region22: #{embeddings_forward.1} parent=5 // pred_check_branch
        %121 = sbr.rel (%p119) target = $region24
      $region23: #{embeddings_forward.1} parent=5 // pred_region
        _
      $region24: #{embeddings_forward.1} parent=5 // pred_fallthru
        _
      %p122 = scmp.le.s32.totalorder 1, %s19
      %p123 = scmp.lt.s32.totalorder %s19, 3
      %p124 = pnand %p122, %p123
      %p125 = pneg %p124
      // Predicated region
      $region25: #{embeddings_forward.1} parent=5 // pred_check
        _
      $region26: #{embeddings_forward.1} parent=5 // pred_check_branch
        %127 = sbr.rel (%p124) target = $region28
      $region27: #{embeddings_forward.1} parent=5 // pred_region
        %s128 = ssub.s32 %s19, 1
        // Predicated region
        $region29: #{embeddings_forward.1} parent=27 // pred_check
          %p129 = pneg %p40
        $region30: #{embeddings_forward.1} parent=27 // pred_check_branch
          %131 = sbr.rel (%p129) target = $region32
        $region31: #{embeddings_forward.1} parent=27 // pred_region
          %132 = dma.done [#allocation5], 4096
        $region32: #{embeddings_forward.1} parent=27 // pred_fallthru
          _
        %p133 = pneg %p40
        %p134 = pneg %p37
        %p135 = pneg %p61
        %p136 = pneg %p58
        %p137 = pneg %p87
        %p138 = pneg %p84
        %s139 = sand.u32 %s74, 1
        %s140 = scalar_lea.sflag [#allocation6], %s139
        %s141 = sand.u32 %s74, 1
        %s142 = smul.addr %s141, 32
        %s143 = scalar_lea.vmem [#allocation7], %s142
        %s144 = smul.u32 %s24, 8
        %s145 = sld [smem:[#allocation3 + %s144]]
        %p146 = scmp.gt.s32.totalorder %s145, 0
        %s147 = scalar_select %p146, %s145, 0
        %p148 = scmp.lt.s32.totalorder %s147, 63
        %s149 = scalar_select %p148, %s147, 63
        %s150 = sshra.s32 %s149, 3
        %s151 = sand.u32 %s149, 7
        %s152 = sshra.s32 %s149, 3
        %s153 = sand.u32 %s149, 7
        %s154 = smul.u32 %s150, 4
        %s155 = smul.u32 %s154, 8
        %s156 = sadd.s32 %s155, %s153
        %s157 = scalar_lea.vmem [#allocation4], %s156
        %v158 = vld [vmem:[%s157] ss:$8 sm:$0xf]
        %s159 = sadd.s32 %s144, 1
        %s160 = sld [smem:[#allocation3 + %s159]]
        %p161 = scmp.gt.s32.totalorder %s160, 0
        %s162 = scalar_select %p161, %s160, 0
        %p163 = scmp.lt.s32.totalorder %s162, 63
        %s164 = scalar_select %p163, %s162, 63
        %s165 = sshra.s32 %s164, 3
        %s166 = sand.u32 %s164, 7
        %s167 = sshra.s32 %s164, 3
        %s168 = sand.u32 %s164, 7
        %s169 = smul.u32 %s165, 4
        %s170 = smul.u32 %s169, 8
        %s171 = sadd.s32 %s170, %s168
        %s172 = scalar_lea.vmem [#allocation4], %s171
        %v173 = vld [vmem:[%s172] ss:$8 sm:$0xf]
        %s174 = sadd.s32 %s144, 2
        %s175 = sld [smem:[#allocation3 + %s174]]
        %p176 = scmp.gt.s32.totalorder %s175, 0
        %s177 = scalar_select %p176, %s175, 0
        %p178 = scmp.lt.s32.totalorder %s177, 63
        %s179 = scalar_select %p178, %s177, 63
        %s180 = sshra.s32 %s179, 3
        %s181 = sand.u32 %s179, 7
        %s182 = sshra.s32 %s179, 3
        %s183 = sand.u32 %s179, 7
        %s184 = smul.u32 %s180, 4
        %s185 = smul.u32 %s184, 8
        %s186 = sadd.s32 %s185, %s183
        %s187 = scalar_lea.vmem [#allocation4], %s186
        %v188 = vld [vmem:[%s187] ss:$8 sm:$0xf]
        %s189 = sadd.s32 %s144, 3
        %s190 = sld [smem:[#allocation3 + %s189]]
        %p191 = scmp.gt.s32.totalorder %s190, 0
        %s192 = scalar_select %p191, %s190, 0
        %p193 = scmp.lt.s32.totalorder %s192, 63
        %s194 = scalar_select %p193, %s192, 63
        %s195 = sshra.s32 %s194, 3
        %s196 = sand.u32 %s194, 7
        %s197 = sshra.s32 %s194, 3
        %s198 = sand.u32 %s194, 7
        %s199 = smul.u32 %s195, 4
        %s200 = smul.u32 %s199, 8
        %s201 = sadd.s32 %s200, %s198
        %s202 = scalar_lea.vmem [#allocation4], %s201
        %v203 = vld [vmem:[%s202] ss:$8 sm:$0xf]
        %s204 = sadd.s32 %s144, 4
        %s205 = sld [smem:[#allocation3 + %s204]]
        %p206 = scmp.gt.s32.totalorder %s205, 0
        %s207 = scalar_select %p206, %s205, 0
        %p208 = scmp.lt.s32.totalorder %s207, 63
        %s209 = scalar_select %p208, %s207, 63
        %s210 = sshra.s32 %s209, 3
        %s211 = sand.u32 %s209, 7
        %s212 = sshra.s32 %s209, 3
        %s213 = sand.u32 %s209, 7
        %s214 = smul.u32 %s210, 4
        %s215 = smul.u32 %s214, 8
        %s216 = sadd.s32 %s215, %s213
        %s217 = scalar_lea.vmem [#allocation4], %s216
        %v218 = vld [vmem:[%s217] ss:$8 sm:$0xf]
        %s219 = sadd.s32 %s144, 5
        %s220 = sld [smem:[#allocation3 + %s219]]
        %p221 = scmp.gt.s32.totalorder %s220, 0
        %s222 = scalar_select %p221, %s220, 0
        %p223 = scmp.lt.s32.totalorder %s222, 63
        %s224 = scalar_select %p223, %s222, 63
        %s225 = sshra.s32 %s224, 3
        %s226 = sand.u32 %s224, 7
        %s227 = sshra.s32 %s224, 3
        %s228 = sand.u32 %s224, 7
        %s229 = smul.u32 %s225, 4
        %s230 = smul.u32 %s229, 8
        %s231 = sadd.s32 %s230, %s228
        %s232 = scalar_lea.vmem [#allocation4], %s231
        %v233 = vld [vmem:[%s232] ss:$8 sm:$0xf]
        %s234 = sadd.s32 %s144, 6
        %s235 = sld [smem:[#allocation3 + %s234]]
        %p236 = scmp.gt.s32.totalorder %s235, 0
        %s237 = scalar_select %p236, %s235, 0
        %p238 = scmp.lt.s32.totalorder %s237, 63
        %s239 = scalar_select %p238, %s237, 63
        %s240 = sshra.s32 %s239, 3
        %s241 = sand.u32 %s239, 7
        %s242 = sshra.s32 %s239, 3
        %s243 = sand.u32 %s239, 7
        %s244 = smul.u32 %s240, 4
        %s245 = smul.u32 %s244, 8
        %s246 = sadd.s32 %s245, %s243
        %s247 = scalar_lea.vmem [#allocation4], %s246
        %v248 = vld [vmem:[%s247] ss:$8 sm:$0xf]
        %s249 = sadd.s32 %s144, 7
        %s250 = sld [smem:[#allocation3 + %s249]]
        %p251 = scmp.gt.s32.totalorder %s250, 0
        %s252 = scalar_select %p251, %s250, 0
        %p253 = scmp.lt.s32.totalorder %s252, 63
        %s254 = scalar_select %p253, %s252, 63
        %s255 = sshra.s32 %s254, 3
        %s256 = sand.u32 %s254, 7
        %s257 = sshra.s32 %s254, 3
        %s258 = sand.u32 %s254, 7
        %s259 = smul.u32 %s255, 4
        %s260 = smul.u32 %s259, 8
        %s261 = sadd.s32 %s260, %s258
        %s262 = scalar_lea.vmem [#allocation4], %s261
        %v263 = vld [vmem:[%s262] ss:$8 sm:$0xf]
        %v265 = vlaneseq
        %v266 = vshrl.u32 %v265, 7
        %v267 = vsub.s32 0, %v266
        %v268 = vrot.slane %v158, %v267
        %v269 = vlaneseq
        %v270 = vshrl.u32 %v269, 7
        %v271 = vsub.s32 1, %v270
        %v272 = vrot.slane %v158, %v271
        %v273 = vlaneseq
        %v274 = vshrl.u32 %v273, 7
        %v275 = vsub.s32 2, %v274
        %v276 = vrot.slane %v158, %v275
        %v277 = vlaneseq
        %v278 = vshrl.u32 %v277, 7
        %v279 = vsub.s32 3, %v278
        %v280 = vrot.slane %v158, %v279
        %v286 = vlaneseq
        %v287 = vshrl.u32 %v286, 7
        %v288 = vsub.s32 0, %v287
        %v289 = vrot.slane %v173, %v288
        %v290 = vlaneseq
        %v291 = vshrl.u32 %v290, 7
        %v292 = vsub.s32 1, %v291
        %v293 = vrot.slane %v173, %v292
        %v294 = vlaneseq
        %v295 = vshrl.u32 %v294, 7
        %v296 = vsub.s32 2, %v295
        %v297 = vrot.slane %v173, %v296
        %v298 = vlaneseq
        %v299 = vshrl.u32 %v298, 7
        %v300 = vsub.s32 3, %v299
        %v301 = vrot.slane %v173, %v300
        %v307 = vlaneseq
        %v308 = vshrl.u32 %v307, 7
        %v309 = vsub.s32 0, %v308
        %v310 = vrot.slane %v188, %v309
        %v311 = vlaneseq
        %v312 = vshrl.u32 %v311, 7
        %v313 = vsub.s32 1, %v312
        %v314 = vrot.slane %v188, %v313
        %v315 = vlaneseq
        %v316 = vshrl.u32 %v315, 7
        %v317 = vsub.s32 2, %v316
        %v318 = vrot.slane %v188, %v317
        %v319 = vlaneseq
        %v320 = vshrl.u32 %v319, 7
        %v321 = vsub.s32 3, %v320
        %v322 = vrot.slane %v188, %v321
        %v328 = vlaneseq
        %v329 = vshrl.u32 %v328, 7
        %v330 = vsub.s32 0, %v329
        %v331 = vrot.slane %v203, %v330
        %v332 = vlaneseq
        %v333 = vshrl.u32 %v332, 7
        %v334 = vsub.s32 1, %v333
        %v335 = vrot.slane %v203, %v334
        %v336 = vlaneseq
        %v337 = vshrl.u32 %v336, 7
        %v338 = vsub.s32 2, %v337
        %v339 = vrot.slane %v203, %v338
        %v340 = vlaneseq
        %v341 = vshrl.u32 %v340, 7
        %v342 = vsub.s32 3, %v341
        %v343 = vrot.slane %v203, %v342
        %v349 = vlaneseq
        %v350 = vshrl.u32 %v349, 7
        %v351 = vsub.s32 0, %v350
        %v352 = vrot.slane %v218, %v351
        %v353 = vlaneseq
        %v354 = vshrl.u32 %v353, 7
        %v355 = vsub.s32 1, %v354
        %v356 = vrot.slane %v218, %v355
        %v357 = vlaneseq
        %v358 = vshrl.u32 %v357, 7
        %v359 = vsub.s32 2, %v358
        %v360 = vrot.slane %v218, %v359
        %v361 = vlaneseq
        %v362 = vshrl.u32 %v361, 7
        %v363 = vsub.s32 3, %v362
        %v364 = vrot.slane %v218, %v363
        %v370 = vlaneseq
        %v371 = vshrl.u32 %v370, 7
        %v372 = vsub.s32 0, %v371
        %v373 = vrot.slane %v233, %v372
        %v374 = vlaneseq
        %v375 = vshrl.u32 %v374, 7
        %v376 = vsub.s32 1, %v375
        %v377 = vrot.slane %v233, %v376
        %v378 = vlaneseq
        %v379 = vshrl.u32 %v378, 7
        %v380 = vsub.s32 2, %v379
        %v381 = vrot.slane %v233, %v380
        %v382 = vlaneseq
        %v383 = vshrl.u32 %v382, 7
        %v384 = vsub.s32 3, %v383
        %v385 = vrot.slane %v233, %v384
        %v391 = vlaneseq
        %v392 = vshrl.u32 %v391, 7
        %v393 = vsub.s32 0, %v392
        %v394 = vrot.slane %v248, %v393
        %v395 = vlaneseq
        %v396 = vshrl.u32 %v395, 7
        %v397 = vsub.s32 1, %v396
        %v398 = vrot.slane %v248, %v397
        %v399 = vlaneseq
        %v400 = vshrl.u32 %v399, 7
        %v401 = vsub.s32 2, %v400
        %v402 = vrot.slane %v248, %v401
        %v403 = vlaneseq
        %v404 = vshrl.u32 %v403, 7
        %v405 = vsub.s32 3, %v404
        %v406 = vrot.slane %v248, %v405
        %v412 = vlaneseq
        %v413 = vshrl.u32 %v412, 7
        %v414 = vsub.s32 0, %v413
        %v415 = vrot.slane %v263, %v414
        %v416 = vlaneseq
        %v417 = vshrl.u32 %v416, 7
        %v418 = vsub.s32 1, %v417
        %v419 = vrot.slane %v263, %v418
        %v420 = vlaneseq
        %v421 = vshrl.u32 %v420, 7
        %v422 = vsub.s32 2, %v421
        %v423 = vrot.slane %v263, %v422
        %v424 = vlaneseq
        %v425 = vshrl.u32 %v424, 7
        %v426 = vsub.s32 3, %v425
        %v427 = vrot.slane %v263, %v426
        %vm432 = vcmask 1040384
        %v433 = vsel %vm432, %v268, %v289
        %v434 = vsel %vm432, %v272, %v293
        %v435 = vsel %vm432, %v276, %v297
        %v436 = vsel %vm432, %v280, %v301
        %vm437 = vcmask 1041408
        %v438 = vsel %vm437, %v433, %v310
        %v439 = vsel %vm437, %v434, %v314
        %v440 = vsel %vm437, %v435, %v318
        %v441 = vsel %vm437, %v436, %v322
        %vm442 = vcmask 1042432
        %v443 = vsel %vm442, %v438, %v331
        %v444 = vsel %vm442, %v439, %v335
        %v445 = vsel %vm442, %v440, %v339
        %v446 = vsel %vm442, %v441, %v343
        %vm447 = vcmask 1043456
        %v448 = vsel %vm447, %v443, %v352
        %v449 = vsel %vm447, %v444, %v356
        %v450 = vsel %vm447, %v445, %v360
        %v451 = vsel %vm447, %v446, %v364
        %vm452 = vcmask 1044480
        %v453 = vsel %vm452, %v448, %v373
        %v454 = vsel %vm452, %v449, %v377
        %v455 = vsel %vm452, %v450, %v381
        %v456 = vsel %vm452, %v451, %v385
        %vm457 = vcmask 1045504
        %v458 = vsel %vm457, %v453, %v394
        %v459 = vsel %vm457, %v454, %v398
        %v460 = vsel %vm457, %v455, %v402
        %v461 = vsel %vm457, %v456, %v406
        %vm462 = vcmask 1046528
        %v463 = vsel %vm462, %v458, %v415
        %v464 = vsel %vm462, %v459, %v419
        %v465 = vsel %vm462, %v460, %v423
        %v466 = vsel %vm462, %v461, %v427
        %v467 = vmul.f32 %v463, 22.627417
        %v468 = vmul.f32 %v464, 22.627417
        %v469 = vmul.f32 %v465, 22.627417
        %v470 = vmul.f32 %v466, 22.627417
        %v471 = vld [vmem:[%s2] sm:$0xff]
        %v472 = vld [vmem:[%s2 + $0x8] sm:$0xff]
        %v473 = vld [vmem:[%s2 + $0x10] sm:$0xff]
        %v474 = vld [vmem:[%s2 + $0x18] sm:$0xff]
        %v475 = vadd.f32 %v467, %v471
        %v476 = vadd.f32 %v468, %v472
        %v477 = vadd.f32 %v469, %v473
        %v478 = vadd.f32 %v470, %v474
        %479 = vst [vmem:[%s143] sm:$0xff] %v475
        %480 = vst [vmem:[%s143 + $0x8] sm:$0xff] %v476
        %481 = vst [vmem:[%s143 + $0x10] sm:$0xff] %v477
        %482 = vst [vmem:[%s143 + $0x18] sm:$0xff] %v478
        %s483 = sand.u32 %s74, 1
        %s484 = scalar_lea.sflag [#allocation6], %s483
        %s485 = sand.u32 %s74, 1
        %s486 = smul.addr %s485, 32
        %s487 = scalar_lea.vmem [#allocation7], %s486
        // Predicated region
        $region33: #{embeddings_forward.1} parent=27 // pred_check
          %p488 = pneg %p84
        $region34: #{embeddings_forward.1} parent=27 // pred_check_branch
          %490 = sbr.rel (%p488) target = $region36
        $region35: #{embeddings_forward.1} parent=27 // pred_region
          %s492 = ssub.s32 512, 512
          %493 = vsyncadd %s484, %s492
          %s494 = smul.addr %s24, 4
          %s495 = smul.addr %s494, 128
          %s496 = scalar_lea.hbm %s3, %s495
          %s498 = sshll.u32 %s487, 4
          %s499 = int_to_ptr.vmem [resolvable:$true] %s498
          %501 = dma.vmem_to_hbm [thread:$0]  %s499, 512, %s496, %s484
        $region36: #{embeddings_forward.1} parent=27 // pred_fallthru
          _
      $region28: #{embeddings_forward.1} parent=5 // pred_fallthru
        _
      %p502 = scmp.le.s32.totalorder 2, %s19
      // Predicated region
      $region37: #{embeddings_forward.1} parent=5 // pred_check
        %p503 = pneg %p502
      $region38: #{embeddings_forward.1} parent=5 // pred_check_branch
        %505 = sbr.rel (%p503) target = $region40
      $region39: #{embeddings_forward.1} parent=5 // pred_region
        %s506 = ssub.s32 %s19, 2
        // Predicated region
        $region41: #{embeddings_forward.1} parent=39 // pred_check
          %p507 = pneg %p90
        $region42: #{embeddings_forward.1} parent=39 // pred_check_branch
          %509 = sbr.rel (%p507) target = $region44
        $region43: #{embeddings_forward.1} parent=39 // pred_region
          %s510 = sand.u32 %s75, 1
          %s511 = scalar_lea.sflag [#allocation6], %s510
          %s512 = sand.u32 %s75, 1
          %s513 = smul.addr %s512, 32
          %s514 = scalar_lea.vmem [#allocation7], %s513
          %515 = dma.done %s511, 512
        $region44: #{embeddings_forward.1} parent=39 // pred_fallthru
          _
      $region40: #{embeddings_forward.1} parent=5 // pred_fallthru
        _
    $region6: #{embeddings_forward.1} parent=1 // loop_footer
      %s23 = sadd.s32 1, %s19
    $region7: #{embeddings_forward.1} parent=1 // loop_footer_branch
      %18 = sbr.rel target = $region3
    $region8: #{embeddings_forward.1} parent=1 // loop_exit
      _
    %516 = vsyncpa [#allocation5], 1
    %s517 = scalar_lea.sflag [#allocation5], 1
    %518 = vsyncpa %s517, 1
    %519 = vsyncpa [#allocation6], 1
    %s520 = scalar_lea.sflag [#allocation6], 1
    %521 = vsyncpa %s520, 1

</llo_original>
